<compile_context>
chip_gen: v7x
topology: tpu7x:2x2x1
jax: 0.10.0
libtpu: 0.0.40
codegen_flags: <defaults>
</compile_context>

<pallas_src>
import functools

import jax
import jax.numpy as jnp
from jax.experimental import pallas as pl
from jax.experimental.pallas import tpu as pltpu


def _round_up(x, m):
    return ((x + m - 1) // m) * m


def _fused_hyper_kernel(z_ref, w2_ref, b2_ref, w1_ref, b1_ref, o_ref,
                        hflat_scr, hin_scr, *, in_size, z_dim):
    """Fused HyperNetwork_CNN forward (batch=False path).

    z_ref  : (1, z_dim)
    w2_ref : (z_dim, in_size*z_dim),  b2_ref : (1, in_size*z_dim)
    w1_ref : (z_dim, n_pad),          b1_ref : (1, n_pad)   (zero-padded cols)
    o_ref  : (in_size, n_pad)
    """
    # ---- layer 1: h_flat = z @ w2 + b2 ------------------- (1, in_size*z_dim)
    hflat_scr[...] = (
        jnp.dot(z_ref[...], w2_ref[...], preferred_element_type=jnp.float32)
        + b2_ref[...])

    # ---- torch row-major .view(in_size, z_dim), done entirely in VMEM ------
    # Explicit row copies instead of a lane->sublane value reshape.
    for i in range(in_size):
        hin_scr[i, :] = hflat_scr[0, i * z_dim:(i + 1) * z_dim]

    # ---- layer 2: h_final = h_in @ w1 + b1 ------------------ (in_size, n_pad)
    o_ref[...] = (
        jnp.dot(hin_scr[...], w1_ref[...], preferred_element_type=jnp.float32)
        + b1_ref[...]).astype(o_ref.dtype)


@functools.partial(jax.jit,
                   static_argnames=("f_size", "z_dim", "out_size", "in_size"))
def hypernetwork_cnn_forward(z, w1, b1, w2, b2, *, f_size, z_dim, out_size,
                             in_size):
    """Non-batch forward of HyperNetwork_CNN.

    z: (z_dim,)  ->  conv kernel of shape (out_size, in_size, f, f) (OIHW).
    """
    n1 = out_size * f_size * f_size            # 144 for the defaults
    n_pad = _round_up(n1, 128)                 # 256: lane-dense output store
    pad = n_pad - n1

    w1_p = jnp.pad(w1, ((0, 0), (0, pad)))                 # (z_dim, n_pad)
    b1_p = jnp.pad(b1, (0, pad)).reshape(1, n_pad)         # (1, n_pad)
    z2d = z.reshape(1, z_dim)
    b2_2d = b2.reshape(1, in_size * z_dim)

    kernel = functools.partial(_fused_hyper_kernel,
                               in_size=in_size, z_dim=z_dim)

    h_final_pad = pl.pallas_call(
        kernel,
        out_shape=jax.ShapeDtypeStruct((in_size, n_pad), jnp.float32),
        scratch_shapes=[
            pltpu.VMEM((1, in_size * z_dim), jnp.float32),   # h_flat
            pltpu.VMEM((in_size, z_dim), jnp.float32),       # h_in
        ],
    )(z2d, w2, b2_2d, w1_p, b1_p)

    # Drop the lane padding, then the row-major OIHW view (same as torch.view).
    h_final = h_final_pad[:, :n1]
    return h_final.reshape(out_size, in_size, f_size, f_size)


def _reference_forward(z, w1, b1, w2, b2, *, f_size, z_dim, out_size, in_size):
    h_in = (z.reshape(1, z_dim) @ w2 + b2).reshape(in_size, z_dim)
    h_final = h_in @ w1 + b1
    return h_final.reshape(out_size, in_size, f_size, f_size)


if __name__ == "__main__":
    # Module defaults: f_size=3, z_dim=64, out_size=16, in_size=16, batch=False
    f_size, z_dim, out_size, in_size = 3, 64, 16, 16

    key = jax.random.PRNGKey(0)
    k_w1, k_b1, k_w2, k_b2, k_z = jax.random.split(key, 5)

    # Deterministic init mirroring torch.fmod(torch.randn(...), 2)
    w1 = jnp.fmod(jax.random.normal(k_w1, (z_dim, out_size * f_size * f_size)),
                  2.0).astype(jnp.float32)
    b1 = jnp.fmod(jax.random.normal(k_b1, (out_size * f_size * f_size,)),
                  2.0).astype(jnp.float32)
    w2 = jnp.fmod(jax.random.normal(k_w2, (z_dim, in_size * z_dim)),
                  2.0).astype(jnp.float32)
    b2 = jnp.fmod(jax.random.normal(k_b2, (in_size * z_dim,)),
                  2.0).astype(jnp.float32)

    z = jax.random.normal(k_z, (z_dim,), dtype=jnp.float32)

    out = hypernetwork_cnn_forward(
        z, w1, b1, w2, b2,
        f_size=f_size, z_dim=z_dim, out_size=out_size, in_size=in_size)
    out = jax.block_until_ready(out)

    ref = _reference_forward(
        z, w1, b1, w2, b2,
        f_size=f_size, z_dim=z_dim, out_size=out_size, in_size=in_size)

    assert out.shape == (out_size, in_size, f_size, f_size)
    assert jnp.allclose(out, ref, atol=1e-4, rtol=1e-4)

    print("KERNEL_OK")
</pallas_src>

<mosaic_0001>
module attributes {stable_mosaic.version = 11 : i64} {
  func.func @_fused_hyper_kernel(%arg0: memref<1x64xf32, #tpu.memory_space<vmem>>, %arg1: memref<64x1024xf32, #tpu.memory_space<vmem>>, %arg2: memref<1x1024xf32, #tpu.memory_space<vmem>>, %arg3: memref<64x256xf32, #tpu.memory_space<vmem>>, %arg4: memref<1x256xf32, #tpu.memory_space<vmem>>, %arg5: memref<16x256xf32, #tpu.memory_space<vmem>>, %arg6: memref<1x1024xf32, #tpu.memory_space<vmem>>, %arg7: memref<16x64xf32, #tpu.memory_space<vmem>>) attributes {dimension_semantics = [], scalar_prefetch = 0 : i64, scratch_operands = 2 : i64, tpu.core_type = #tpu.core_type<tc>} {
    %c0 = arith.constant 0 : index
    %c0_0 = arith.constant 0 : index
    %0 = vector.load %arg0[%c0, %c0_0] : memref<1x64xf32, #tpu.memory_space<vmem>>, vector<1x64xf32>
    %c0_1 = arith.constant 0 : index
    %c0_2 = arith.constant 0 : index
    %1 = vector.load %arg1[%c0_1, %c0_2] : memref<64x1024xf32, #tpu.memory_space<vmem>>, vector<64x1024xf32>
    %cst = arith.constant dense<0.000000e+00> : vector<1x1024xf32>
    %2 = tpu.matmul %0, %1, %cst {dimension_numbers = #tpu.dot_dimension_numbers<[1], [0], [0], [1], [0, 0, 1, 1], [], []>} : vector<1x64xf32>, vector<64x1024xf32>, vector<1x1024xf32> -> vector<1x1024xf32>
    %c0_3 = arith.constant 0 : index
    %c0_4 = arith.constant 0 : index
    %3 = vector.load %arg2[%c0_3, %c0_4] : memref<1x1024xf32, #tpu.memory_space<vmem>>, vector<1x1024xf32>
    %4 = arith.addf %2, %3 : vector<1x1024xf32>
    %c0_5 = arith.constant 0 : index
    %c0_6 = arith.constant 0 : index
    %5 = vector.load %arg6[%c0_5, %c0_6] : memref<1x1024xf32, #tpu.memory_space<vmem>>, vector<1x1024xf32>
    tpu.vector_store %arg6[%c0_5, %c0_6], %4 {strides = array<i32>} : memref<1x1024xf32, #tpu.memory_space<vmem>>, vector<1x1024xf32>,
    %c0_7 = arith.constant 0 : index
    %c0_8 = arith.constant 0 : index
    %6 = vector.load %arg6[%c0_7, %c0_8] : memref<1x1024xf32, #tpu.memory_space<vmem>>, vector<1x64xf32>
    %7 = vector.shape_cast %6 : vector<1x64xf32> to vector<64xf32>
    %c0_9 = arith.constant 0 : index
    %c0_10 = arith.constant 0 : index
    %8 = vector.load %arg7[%c0_9, %c0_10] : memref<16x64xf32, #tpu.memory_space<vmem>>, vector<1x64xf32>
    %9 = vector.shape_cast %8 : vector<1x64xf32> to vector<64xf32>
    %10 = vector.shape_cast %7 : vector<64xf32> to vector<1x64xf32>
    tpu.vector_store %arg7[%c0_9, %c0_10], %10 {strides = array<i32>} : memref<16x64xf32, #tpu.memory_space<vmem>>, vector<1x64xf32>,
    %c0_11 = arith.constant 0 : index
    %c64 = arith.constant 64 : index
    %11 = vector.load %arg6[%c0_11, %c64] : memref<1x1024xf32, #tpu.memory_space<vmem>>, vector<1x64xf32>
    %12 = vector.shape_cast %11 : vector<1x64xf32> to vector<64xf32>
    %c1 = arith.constant 1 : index
    %c0_12 = arith.constant 0 : index
    %13 = vector.load %arg7[%c1, %c0_12] : memref<16x64xf32, #tpu.memory_space<vmem>>, vector<1x64xf32>
    %14 = vector.shape_cast %13 : vector<1x64xf32> to vector<64xf32>
    %15 = vector.shape_cast %12 : vector<64xf32> to vector<1x64xf32>
    tpu.vector_store %arg7[%c1, %c0_12], %15 {strides = array<i32>} : memref<16x64xf32, #tpu.memory_space<vmem>>, vector<1x64xf32>,
    %c0_13 = arith.constant 0 : index
    %c128 = arith.constant 128 : index
    %16 = vector.load %arg6[%c0_13, %c128] : memref<1x1024xf32, #tpu.memory_space<vmem>>, vector<1x64xf32>
    %17 = vector.shape_cast %16 : vector<1x64xf32> to vector<64xf32>
    %c2 = arith.constant 2 : index
    %c0_14 = arith.constant 0 : index
    %18 = vector.load %arg7[%c2, %c0_14] : memref<16x64xf32, #tpu.memory_space<vmem>>, vector<1x64xf32>
    %19 = vector.shape_cast %18 : vector<1x64xf32> to vector<64xf32>
    %20 = vector.shape_cast %17 : vector<64xf32> to vector<1x64xf32>
    tpu.vector_store %arg7[%c2, %c0_14], %20 {strides = array<i32>} : memref<16x64xf32, #tpu.memory_space<vmem>>, vector<1x64xf32>,
    %c0_15 = arith.constant 0 : index
    %c192 = arith.constant 192 : index
    %21 = vector.load %arg6[%c0_15, %c192] : memref<1x1024xf32, #tpu.memory_space<vmem>>, vector<1x64xf32>
    %22 = vector.shape_cast %21 : vector<1x64xf32> to vector<64xf32>
    %c3 = arith.constant 3 : index
    %c0_16 = arith.constant 0 : index
    %23 = vector.load %arg7[%c3, %c0_16] : memref<16x64xf32, #tpu.memory_space<vmem>>, vector<1x64xf32>
    %24 = vector.shape_cast %23 : vector<1x64xf32> to vector<64xf32>
    %25 = vector.shape_cast %22 : vector<64xf32> to vector<1x64xf32>
    tpu.vector_store %arg7[%c3, %c0_16], %25 {strides = array<i32>} : memref<16x64xf32, #tpu.memory_space<vmem>>, vector<1x64xf32>,
    %c0_17 = arith.constant 0 : index
    %c256 = arith.constant 256 : index
    %26 = vector.load %arg6[%c0_17, %c256] : memref<1x1024xf32, #tpu.memory_space<vmem>>, vector<1x64xf32>
    %27 = vector.shape_cast %26 : vector<1x64xf32> to vector<64xf32>
    %c4 = arith.constant 4 : index
    %c0_18 = arith.constant 0 : index
    %28 = vector.load %arg7[%c4, %c0_18] : memref<16x64xf32, #tpu.memory_space<vmem>>, vector<1x64xf32>
    %29 = vector.shape_cast %28 : vector<1x64xf32> to vector<64xf32>
    %30 = vector.shape_cast %27 : vector<64xf32> to vector<1x64xf32>
    tpu.vector_store %arg7[%c4, %c0_18], %30 {strides = array<i32>} : memref<16x64xf32, #tpu.memory_space<vmem>>, vector<1x64xf32>,
    %c0_19 = arith.constant 0 : index
    %c320 = arith.constant 320 : index
    %31 = vector.load %arg6[%c0_19, %c320] : memref<1x1024xf32, #tpu.memory_space<vmem>>, vector<1x64xf32>
    %32 = vector.shape_cast %31 : vector<1x64xf32> to vector<64xf32>
    %c5 = arith.constant 5 : index
    %c0_20 = arith.constant 0 : index
    %33 = vector.load %arg7[%c5, %c0_20] : memref<16x64xf32, #tpu.memory_space<vmem>>, vector<1x64xf32>
    %34 = vector.shape_cast %33 : vector<1x64xf32> to vector<64xf32>
    %35 = vector.shape_cast %32 : vector<64xf32> to vector<1x64xf32>
    tpu.vector_store %arg7[%c5, %c0_20], %35 {strides = array<i32>} : memref<16x64xf32, #tpu.memory_space<vmem>>, vector<1x64xf32>,
    %c0_21 = arith.constant 0 : index
    %c384 = arith.constant 384 : index
    %36 = vector.load %arg6[%c0_21, %c384] : memref<1x1024xf32, #tpu.memory_space<vmem>>, vector<1x64xf32>
    %37 = vector.shape_cast %36 : vector<1x64xf32> to vector<64xf32>
    %c6 = arith.constant 6 : index
    %c0_22 = arith.constant 0 : index
    %38 = vector.load %arg7[%c6, %c0_22] : memref<16x64xf32, #tpu.memory_space<vmem>>, vector<1x64xf32>
    %39 = vector.shape_cast %38 : vector<1x64xf32> to vector<64xf32>
    %40 = vector.shape_cast %37 : vector<64xf32> to vector<1x64xf32>
    tpu.vector_store %arg7[%c6, %c0_22], %40 {strides = array<i32>} : memref<16x64xf32, #tpu.memory_space<vmem>>, vector<1x64xf32>,
    %c0_23 = arith.constant 0 : index
    %c448 = arith.constant 448 : index
    %41 = vector.load %arg6[%c0_23, %c448] : memref<1x1024xf32, #tpu.memory_space<vmem>>, vector<1x64xf32>
    %42 = vector.shape_cast %41 : vector<1x64xf32> to vector<64xf32>
    %c7 = arith.constant 7 : index
    %c0_24 = arith.constant 0 : index
    %43 = vector.load %arg7[%c7, %c0_24] : memref<16x64xf32, #tpu.memory_space<vmem>>, vector<1x64xf32>
    %44 = vector.shape_cast %43 : vector<1x64xf32> to vector<64xf32>
    %45 = vector.shape_cast %42 : vector<64xf32> to vector<1x64xf32>
    tpu.vector_store %arg7[%c7, %c0_24], %45 {strides = array<i32>} : memref<16x64xf32, #tpu.memory_space<vmem>>, vector<1x64xf32>,
    %c0_25 = arith.constant 0 : index
    %c512 = arith.constant 512 : index
    %46 = vector.load %arg6[%c0_25, %c512] : memref<1x1024xf32, #tpu.memory_space<vmem>>, vector<1x64xf32>
    %47 = vector.shape_cast %46 : vector<1x64xf32> to vector<64xf32>
    %c8 = arith.constant 8 : index
    %c0_26 = arith.constant 0 : index
    %48 = vector.load %arg7[%c8, %c0_26] : memref<16x64xf32, #tpu.memory_space<vmem>>, vector<1x64xf32>
    %49 = vector.shape_cast %48 : vector<1x64xf32> to vector<64xf32>
    %50 = vector.shape_cast %47 : vector<64xf32> to vector<1x64xf32>
    tpu.vector_store %arg7[%c8, %c0_26], %50 {strides = array<i32>} : memref<16x64xf32, #tpu.memory_space<vmem>>, vector<1x64xf32>,
    %c0_27 = arith.constant 0 : index
    %c576 = arith.constant 576 : index
    %51 = vector.load %arg6[%c0_27, %c576] : memref<1x1024xf32, #tpu.memory_space<vmem>>, vector<1x64xf32>
    %52 = vector.shape_cast %51 : vector<1x64xf32> to vector<64xf32>
    %c9 = arith.constant 9 : index
    %c0_28 = arith.constant 0 : index
    %53 = vector.load %arg7[%c9, %c0_28] : memref<16x64xf32, #tpu.memory_space<vmem>>, vector<1x64xf32>
    %54 = vector.shape_cast %53 : vector<1x64xf32> to vector<64xf32>
    %55 = vector.shape_cast %52 : vector<64xf32> to vector<1x64xf32>
    tpu.vector_store %arg7[%c9, %c0_28], %55 {strides = array<i32>} : memref<16x64xf32, #tpu.memory_space<vmem>>, vector<1x64xf32>,
    %c0_29 = arith.constant 0 : index
    %c640 = arith.constant 640 : index
    %56 = vector.load %arg6[%c0_29, %c640] : memref<1x1024xf32, #tpu.memory_space<vmem>>, vector<1x64xf32>
    %57 = vector.shape_cast %56 : vector<1x64xf32> to vector<64xf32>
    %c10 = arith.constant 10 : index
    %c0_30 = arith.constant 0 : index
    %58 = vector.load %arg7[%c10, %c0_30] : memref<16x64xf32, #tpu.memory_space<vmem>>, vector<1x64xf32>
    %59 = vector.shape_cast %58 : vector<1x64xf32> to vector<64xf32>
    %60 = vector.shape_cast %57 : vector<64xf32> to vector<1x64xf32>
    tpu.vector_store %arg7[%c10, %c0_30], %60 {strides = array<i32>} : memref<16x64xf32, #tpu.memory_space<vmem>>, vector<1x64xf32>,
    %c0_31 = arith.constant 0 : index
    %c704 = arith.constant 704 : index
    %61 = vector.load %arg6[%c0_31, %c704] : memref<1x1024xf32, #tpu.memory_space<vmem>>, vector<1x64xf32>
    %62 = vector.shape_cast %61 : vector<1x64xf32> to vector<64xf32>
    %c11 = arith.constant 11 : index
    %c0_32 = arith.constant 0 : index
    %63 = vector.load %arg7[%c11, %c0_32] : memref<16x64xf32, #tpu.memory_space<vmem>>, vector<1x64xf32>
    %64 = vector.shape_cast %63 : vector<1x64xf32> to vector<64xf32>
    %65 = vector.shape_cast %62 : vector<64xf32> to vector<1x64xf32>
    tpu.vector_store %arg7[%c11, %c0_32], %65 {strides = array<i32>} : memref<16x64xf32, #tpu.memory_space<vmem>>, vector<1x64xf32>,
    %c0_33 = arith.constant 0 : index
    %c768 = arith.constant 768 : index
    %66 = vector.load %arg6[%c0_33, %c768] : memref<1x1024xf32, #tpu.memory_space<vmem>>, vector<1x64xf32>
    %67 = vector.shape_cast %66 : vector<1x64xf32> to vector<64xf32>
    %c12 = arith.constant 12 : index
    %c0_34 = arith.constant 0 : index
    %68 = vector.load %arg7[%c12, %c0_34] : memref<16x64xf32, #tpu.memory_space<vmem>>, vector<1x64xf32>
    %69 = vector.shape_cast %68 : vector<1x64xf32> to vector<64xf32>
    %70 = vector.shape_cast %67 : vector<64xf32> to vector<1x64xf32>
    tpu.vector_store %arg7[%c12, %c0_34], %70 {strides = array<i32>} : memref<16x64xf32, #tpu.memory_space<vmem>>, vector<1x64xf32>,
    %c0_35 = arith.constant 0 : index
    %c832 = arith.constant 832 : index
    %71 = vector.load %arg6[%c0_35, %c832] : memref<1x1024xf32, #tpu.memory_space<vmem>>, vector<1x64xf32>
    %72 = vector.shape_cast %71 : vector<1x64xf32> to vector<64xf32>
    %c13 = arith.constant 13 : index
    %c0_36 = arith.constant 0 : index
    %73 = vector.load %arg7[%c13, %c0_36] : memref<16x64xf32, #tpu.memory_space<vmem>>, vector<1x64xf32>
    %74 = vector.shape_cast %73 : vector<1x64xf32> to vector<64xf32>
    %75 = vector.shape_cast %72 : vector<64xf32> to vector<1x64xf32>
    tpu.vector_store %arg7[%c13, %c0_36], %75 {strides = array<i32>} : memref<16x64xf32, #tpu.memory_space<vmem>>, vector<1x64xf32>,
    %c0_37 = arith.constant 0 : index
    %c896 = arith.constant 896 : index
    %76 = vector.load %arg6[%c0_37, %c896] : memref<1x1024xf32, #tpu.memory_space<vmem>>, vector<1x64xf32>
    %77 = vector.shape_cast %76 : vector<1x64xf32> to vector<64xf32>
    %c14 = arith.constant 14 : index
    %c0_38 = arith.constant 0 : index
    %78 = vector.load %arg7[%c14, %c0_38] : memref<16x64xf32, #tpu.memory_space<vmem>>, vector<1x64xf32>
    %79 = vector.shape_cast %78 : vector<1x64xf32> to vector<64xf32>
    %80 = vector.shape_cast %77 : vector<64xf32> to vector<1x64xf32>
    tpu.vector_store %arg7[%c14, %c0_38], %80 {strides = array<i32>} : memref<16x64xf32, #tpu.memory_space<vmem>>, vector<1x64xf32>,
    %c0_39 = arith.constant 0 : index
    %c960 = arith.constant 960 : index
    %81 = vector.load %arg6[%c0_39, %c960] : memref<1x1024xf32, #tpu.memory_space<vmem>>, vector<1x64xf32>
    %82 = vector.shape_cast %81 : vector<1x64xf32> to vector<64xf32>
    %c15 = arith.constant 15 : index
    %c0_40 = arith.constant 0 : index
    %83 = vector.load %arg7[%c15, %c0_40] : memref<16x64xf32, #tpu.memory_space<vmem>>, vector<1x64xf32>
    %84 = vector.shape_cast %83 : vector<1x64xf32> to vector<64xf32>
    %85 = vector.shape_cast %82 : vector<64xf32> to vector<1x64xf32>
    tpu.vector_store %arg7[%c15, %c0_40], %85 {strides = array<i32>} : memref<16x64xf32, #tpu.memory_space<vmem>>, vector<1x64xf32>,
    %c0_41 = arith.constant 0 : index
    %c0_42 = arith.constant 0 : index
    %86 = vector.load %arg7[%c0_41, %c0_42] : memref<16x64xf32, #tpu.memory_space<vmem>>, vector<16x64xf32>
    %c0_43 = arith.constant 0 : index
    %c0_44 = arith.constant 0 : index
    %87 = vector.load %arg3[%c0_43, %c0_44] : memref<64x256xf32, #tpu.memory_space<vmem>>, vector<64x256xf32>
    %cst_45 = arith.constant dense<0.000000e+00> : vector<16x256xf32>
    %88 = tpu.matmul %86, %87, %cst_45 {dimension_numbers = #tpu.dot_dimension_numbers<[1], [0], [0], [1], [0, 0, 1, 1], [], []>} : vector<16x64xf32>, vector<64x256xf32>, vector<16x256xf32> -> vector<16x256xf32>
    %c0_46 = arith.constant 0 : index
    %c0_47 = arith.constant 0 : index
    %89 = vector.load %arg4[%c0_46, %c0_47] : memref<1x256xf32, #tpu.memory_space<vmem>>, vector<1x256xf32>
    %90 = vector.broadcast %89 : vector<1x256xf32> to vector<16x256xf32>
    %91 = arith.addf %88, %90 : vector<16x256xf32>
    %c0_48 = arith.constant 0 : index
    %c0_49 = arith.constant 0 : index
    %92 = vector.load %arg5[%c0_48, %c0_49] : memref<16x256xf32, #tpu.memory_space<vmem>>, vector<16x256xf32>
    tpu.vector_store %arg5[%c0_48, %c0_49], %91 {strides = array<i32>} : memref<16x256xf32, #tpu.memory_space<vmem>>, vector<16x256xf32>,
    return
  }
}

</mosaic_0001>

<llo_original>
// kernel: hypernetwork_cnn_forward.1
$region0: #{hypernetwork_cnn_forward.1}
  #allocation0 [shape = 'u32[]', space=smem, size = 0x4, offset = 0x4, fixed_abs, tag = 'smem constant byte address 0x4 - core index']
  #allocation1 [shape = 'u32[144,128]{1,0:T(1,128)}', space=vmem, size = 0x12000, scoped, tag = 'internal scratch']
  #allocation2 [shape = 'f32[1,1024]{1,0:T(1,128)}', space=vmem, size = 0x1000, scoped, tag = 'scratch operand']
  #allocation3 [shape = 'f32[16,64]{1,0:T(8,128)}', space=vmem, size = 0x2000, scoped, tag = 'scratch operand']
  %s0 = inlined_call_operand.vmem [shape: f32[1,64], index: 0, kind: input, shape index: {}]
  %s1 = inlined_call_operand.hbm [shape: f32[64,1024], index: 1, kind: input, shape index: {}]
  %s2 = inlined_call_operand.vmem [shape: f32[1,1024], index: 2, kind: input, shape index: {}]
  %s3 = inlined_call_operand.vmem [shape: f32[64,256], index: 3, kind: input, shape index: {}]
  %s4 = inlined_call_operand.vmem [shape: f32[1,256], index: 4, kind: input, shape index: {}]
  %s5 = inlined_call_operand.vmem [shape: f32[16,256], index: 5, kind: output, shape index: {}]
  %s6 = sld [smem:[#allocation0]]
  $region34: #{hypernetwork_cnn_forward.1} parent=0
    _
  %s8 = ssub.s32 1, %s6
  %s9 = scalar_select 0, %s8, %s6
  $region1: #{hypernetwork_cnn_forward.1} parent=0
    #allocation4 [shape = 'u8[262144]{0}', space=vmem, size = 0x40000, scoped, tag = 'input window, operand 1, single buffered']
    #allocation5 [shape = 's32[1]{0}', space=sflag, size = 0x4, scoped, tag = 'scoped memory for hypernetwork_cnn_forward.1']
    %10 = vsyncpa [#allocation5], 0
    // Predicated region
    $region2: #{hypernetwork_cnn_forward.1} parent=1 // pred_check
      _
    $region3: #{hypernetwork_cnn_forward.1} parent=1 // pred_check_branch
      %12 = sbr.rel (0) target = $region5
    $region4: #{hypernetwork_cnn_forward.1} parent=1 // pred_region
      _
    $region5: #{hypernetwork_cnn_forward.1} parent=1 // pred_fallthru
      _
    // Predicated region
    $region6: #{hypernetwork_cnn_forward.1} parent=1 // pred_check
      _
    $region7: #{hypernetwork_cnn_forward.1} parent=1 // pred_check_branch
      %14 = sbr.rel (0) target = $region9
    $region8: #{hypernetwork_cnn_forward.1} parent=1 // pred_region
      %s16 = ssub.s32 8192, 8192
      %17 = vsyncadd [#allocation5], %s16
      %s18 = sshll.u32 [#allocation4], 4
      %s19 = int_to_ptr.vmem [resolvable:$true] %s18
      %24 = dma.hbm_to_vmem [thread:$0]  %s1, 8192, %s19, [#allocation5], 1024, 1024, 64
    $region9: #{hypernetwork_cnn_forward.1} parent=1 // pred_fallthru
      _
    // Predicated region
    $region10: #{hypernetwork_cnn_forward.1} parent=1 // pred_check
      _
    $region11: #{hypernetwork_cnn_forward.1} parent=1 // pred_check_branch
      %26 = sbr.rel (0) target = $region13
    $region12: #{hypernetwork_cnn_forward.1} parent=1 // pred_region
      _
    $region13: #{hypernetwork_cnn_forward.1} parent=1 // pred_fallthru
      _
    // Predicated region
    $region14: #{hypernetwork_cnn_forward.1} parent=1 // pred_check
      _
    $region15: #{hypernetwork_cnn_forward.1} parent=1 // pred_check_branch
      %28 = sbr.rel (0) target = $region17
    $region16: #{hypernetwork_cnn_forward.1} parent=1 // pred_region
      _
    $region17: #{hypernetwork_cnn_forward.1} parent=1 // pred_fallthru
      _
    // Predicated region
    $region18: #{hypernetwork_cnn_forward.1} parent=1 // pred_check
      _
    $region19: #{hypernetwork_cnn_forward.1} parent=1 // pred_check_branch
      %30 = sbr.rel (0) target = $region21
    $region20: #{hypernetwork_cnn_forward.1} parent=1 // pred_region
      _
    $region21: #{hypernetwork_cnn_forward.1} parent=1 // pred_fallthru
      _
    // Predicated region
    $region22: #{hypernetwork_cnn_forward.1} parent=1 // pred_check
      _
    $region23: #{hypernetwork_cnn_forward.1} parent=1 // pred_check_branch
      %32 = sbr.rel (0) target = $region25
    $region24: #{hypernetwork_cnn_forward.1} parent=1 // pred_region
      %33 = dma.done [#allocation5], 8192
    $region25: #{hypernetwork_cnn_forward.1} parent=1 // pred_fallthru
      _
    %v34 = vld [vmem:[%s0] sm:$0x1]
    %v35 = vld [vmem:[#allocation4] sm:$0xff]
    %v36 = vld [vmem:[#allocation4 + $0x8] sm:$0xff]
    %v37 = vld [vmem:[#allocation4 + $0x10] sm:$0xff]
    %v38 = vld [vmem:[#allocation4 + $0x18] sm:$0xff]
    %v39 = vld [vmem:[#allocation4 + $0x20] sm:$0xff]
    %v40 = vld [vmem:[#allocation4 + $0x28] sm:$0xff]
    %v41 = vld [vmem:[#allocation4 + $0x30] sm:$0xff]
    %v42 = vld [vmem:[#allocation4 + $0x38] sm:$0xff]
    %v43 = vld [vmem:[#allocation4 + $0x40] sm:$0xff]
    %v44 = vld [vmem:[#allocation4 + $0x48] sm:$0xff]
    %v45 = vld [vmem:[#allocation4 + $0x50] sm:$0xff]
    %v46 = vld [vmem:[#allocation4 + $0x58] sm:$0xff]
    %v47 = vld [vmem:[#allocation4 + $0x60] sm:$0xff]
    %v48 = vld [vmem:[#allocation4 + $0x68] sm:$0xff]
    %v49 = vld [vmem:[#allocation4 + $0x70] sm:$0xff]
    %v50 = vld [vmem:[#allocation4 + $0x78] sm:$0xff]
    %v51 = vld [vmem:[#allocation4 + $0x80] sm:$0xff]
    %v52 = vld [vmem:[#allocation4 + $0x88] sm:$0xff]
    %v53 = vld [vmem:[#allocation4 + $0x90] sm:$0xff]
    %v54 = vld [vmem:[#allocation4 + $0x98] sm:$0xff]
    %v55 = vld [vmem:[#allocation4 + $0xa0] sm:$0xff]
    %v56 = vld [vmem:[#allocation4 + $0xa8] sm:$0xff]
    %v57 = vld [vmem:[#allocation4 + $0xb0] sm:$0xff]
    %v58 = vld [vmem:[#allocation4 + $0xb8] sm:$0xff]
    %v59 = vld [vmem:[#allocation4 + $0xc0] sm:$0xff]
    %v60 = vld [vmem:[#allocation4 + $0xc8] sm:$0xff]
    %v61 = vld [vmem:[#allocation4 + $0xd0] sm:$0xff]
    %v62 = vld [vmem:[#allocation4 + $0xd8] sm:$0xff]
    %v63 = vld [vmem:[#allocation4 + $0xe0] sm:$0xff]
    %v64 = vld [vmem:[#allocation4 + $0xe8] sm:$0xff]
    %v65 = vld [vmem:[#allocation4 + $0xf0] sm:$0xff]
    %v66 = vld [vmem:[#allocation4 + $0xf8] sm:$0xff]
    %v67 = vld [vmem:[#allocation4 + $0x100] sm:$0xff]
    %v68 = vld [vmem:[#allocation4 + $0x108] sm:$0xff]
    %v69 = vld [vmem:[#allocation4 + $0x110] sm:$0xff]
    %v70 = vld [vmem:[#allocation4 + $0x118] sm:$0xff]
    %v71 = vld [vmem:[#allocation4 + $0x120] sm:$0xff]
    %v72 = vld [vmem:[#allocation4 + $0x128] sm:$0xff]
    %v73 = vld [vmem:[#allocation4 + $0x130] sm:$0xff]
    %v74 = vld [vmem:[#allocation4 + $0x138] sm:$0xff]
    %v75 = vld [vmem:[#allocation4 + $0x140] sm:$0xff]
    %v76 = vld [vmem:[#allocation4 + $0x148] sm:$0xff]
    %v77 = vld [vmem:[#allocation4 + $0x150] sm:$0xff]
    %v78 = vld [vmem:[#allocation4 + $0x158] sm:$0xff]
    %v79 = vld [vmem:[#allocation4 + $0x160] sm:$0xff]
    %v80 = vld [vmem:[#allocation4 + $0x168] sm:$0xff]
    %v81 = vld [vmem:[#allocation4 + $0x170] sm:$0xff]
    %v82 = vld [vmem:[#allocation4 + $0x178] sm:$0xff]
    %v83 = vld [vmem:[#allocation4 + $0x180] sm:$0xff]
    %v84 = vld [vmem:[#allocation4 + $0x188] sm:$0xff]
    %v85 = vld [vmem:[#allocation4 + $0x190] sm:$0xff]
    %v86 = vld [vmem:[#allocation4 + $0x198] sm:$0xff]
    %v87 = vld [vmem:[#allocation4 + $0x1a0] sm:$0xff]
    %v88 = vld [vmem:[#allocation4 + $0x1a8] sm:$0xff]
    %v89 = vld [vmem:[#allocation4 + $0x1b0] sm:$0xff]
    %v90 = vld [vmem:[#allocation4 + $0x1b8] sm:$0xff]
    %v91 = vld [vmem:[#allocation4 + $0x1c0] sm:$0xff]
    %v92 = vld [vmem:[#allocation4 + $0x1c8] sm:$0xff]
    %v93 = vld [vmem:[#allocation4 + $0x1d0] sm:$0xff]
    %v94 = vld [vmem:[#allocation4 + $0x1d8] sm:$0xff]
    %v95 = vld [vmem:[#allocation4 + $0x1e0] sm:$0xff]
    %v96 = vld [vmem:[#allocation4 + $0x1e8] sm:$0xff]
    %v97 = vld [vmem:[#allocation4 + $0x1f0] sm:$0xff]
    %v98 = vld [vmem:[#allocation4 + $0x1f8] sm:$0xff]
    %v99 = vld [vmem:[%s2] sm:$0xff]
    %v101 = vlaneseq
    %v102 = vshrl.u32 %v101, 7
    %v103 = vsub.s32 0, %v102
    %v104 = vrot.slane %v99, %v103
    %v105 = vlaneseq
    %v106 = vshrl.u32 %v105, 7
    %v107 = vsub.s32 1, %v106
    %v108 = vrot.slane %v99, %v107
    %v109 = vlaneseq
    %v110 = vshrl.u32 %v109, 7
    %v111 = vsub.s32 2, %v110
    %v112 = vrot.slane %v99, %v111
    %v113 = vlaneseq
    %v114 = vshrl.u32 %v113, 7
    %v115 = vsub.s32 3, %v114
    %v116 = vrot.slane %v99, %v115
    %v117 = vlaneseq
    %v118 = vshrl.u32 %v117, 7
    %v119 = vsub.s32 4, %v118
    %v120 = vrot.slane %v99, %v119
    %v121 = vlaneseq
    %v122 = vshrl.u32 %v121, 7
    %v123 = vsub.s32 5, %v122
    %v124 = vrot.slane %v99, %v123
    %v125 = vlaneseq
    %v126 = vshrl.u32 %v125, 7
    %v127 = vsub.s32 6, %v126
    %v128 = vrot.slane %v99, %v127
    %v129 = vlaneseq
    %v130 = vshrl.u32 %v129, 7
    %v131 = vsub.s32 7, %v130
    %v132 = vrot.slane %v99, %v131
    %vm141 = vcmask 523264
    %v143 = vsel %vm141, %v34, 0
    %145 = vmatprep.subr.mxu0 %v36
    %146 = vmatpush1.msra.mxu0 %v35
    %147 = vmatprep.subr.mxu0 %v44
    %148 = vmatpush1.msra.mxu0 %v43
    %149 = vmatprep.subr.mxu0 %v52
    %150 = vmatpush1.msra.mxu0 %v51
    %151 = vmatprep.subr.mxu0 %v60
    %152 = vmatpush1.msra.mxu0 %v59
    %153 = vmatprep.subr.mxu0 %v68
    %154 = vmatpush1.msra.mxu0 %v67
    %155 = vmatprep.subr.mxu0 %v76
    %156 = vmatpush1.msra.mxu0 %v75
    %157 = vmatprep.subr.mxu0 %v84
    %158 = vmatpush1.msra.mxu0 %v83
    %159 = vmatprep.subr.mxu0 %v92
    %160 = vmatpush1.msra.mxu0 %v91
    %161 = vmatprep.subr.mxu0 0.0
    %162 = vmatpush1.msra.mxu0 0.0
    %163 = vmatprep.subr.mxu0 0.0
    %164 = vmatpush1.msra.mxu0 0.0
    %165 = vmatprep.subr.mxu0 0.0
    %166 = vmatpush1.msra.mxu0 0.0
    %167 = vmatprep.subr.mxu0 0.0
    %168 = vmatpush1.msra.mxu0 0.0
    %169 = vmatprep.subr.mxu0 0.0
    %170 = vmatpush1.msra.mxu0 0.0
    %171 = vmatprep.subr.mxu0 0.0
    %172 = vmatpush1.msra.mxu0 0.0
    %173 = vmatprep.subr.mxu0 0.0
    %174 = vmatpush1.msra.mxu0 0.0
    %175 = vmatprep.subr.mxu0 0.0
    %176 = vmatpush1.msra.mxu0 0.0
    %177 = vmatprep.subr.mxu0 0.0
    %178 = vmatpush1.msra.mxu0 0.0
    %179 = vmatprep.subr.mxu0 0.0
    %180 = vmatpush1.msra.mxu0 0.0
    %181 = vmatprep.subr.mxu0 0.0
    %182 = vmatpush1.msra.mxu0 0.0
    %183 = vmatprep.subr.mxu0 0.0
    %184 = vmatpush1.msra.mxu0 0.0
    %185 = vmatprep.subr.mxu0 0.0
    %186 = vmatpush1.msra.mxu0 0.0
    %187 = vmatprep.subr.mxu0 0.0
    %188 = vmatpush1.msra.mxu0 0.0
    %189 = vmatprep.subr.mxu0 0.0
    %190 = vmatpush1.msra.mxu0 0.0
    %191 = vmatprep.subr.mxu0 0.0
    %192 = vmatpush1.msra.mxu0 0.0
    %193 = vmatprep.subr.mxu0 0.0
    %194 = vmatpush1.msra.mxu0 0.0
    %195 = vmatprep.subr.mxu0 0.0
    %196 = vmatpush1.msra.mxu0 0.0
    %197 = vmatprep.subr.mxu0 0.0
    %198 = vmatpush1.msra.mxu0 0.0
    %199 = vmatprep.subr.mxu0 0.0
    %200 = vmatpush1.msra.mxu0 0.0
    %201 = vmatprep.subr.mxu0 0.0
    %202 = vmatpush1.msra.mxu0 0.0
    %203 = vmatprep.subr.mxu0 0.0
    %204 = vmatpush1.msra.mxu0 0.0
    %205 = vmatprep.subr.mxu0 0.0
    %206 = vmatpush1.msra.mxu0 0.0
    %207 = vmatprep.subr.mxu0 0.0
    %208 = vmatpush1.msra.mxu0 0.0
    %209 = vmatprep.mubr.f32.mxu0 0.0
    %210 = vmatmul.mubr.f32.gmra.mrb[0].mxu0 %v143
    %v211 = vpop.f32.mrb[0].mxu0
    %v212 = vadd.f32 %v104, %v211
    %v213 = vpop.f32.mrb[0].mxu0
    %v214 = vadd.f32 %v108, %v213
    %215 = vdwg.mxu0
    %216 = vmatprep.subr.mxu0 %v38
    %217 = vmatpush1.msra.mxu0 %v37
    %218 = vmatprep.subr.mxu0 %v46
    %219 = vmatpush1.msra.mxu0 %v45
    %220 = vmatprep.subr.mxu0 %v54
    %221 = vmatpush1.msra.mxu0 %v53
    %222 = vmatprep.subr.mxu0 %v62
    %223 = vmatpush1.msra.mxu0 %v61
    %224 = vmatprep.subr.mxu0 %v70
    %225 = vmatpush1.msra.mxu0 %v69
    %226 = vmatprep.subr.mxu0 %v78
    %227 = vmatpush1.msra.mxu0 %v77
    %228 = vmatprep.subr.mxu0 %v86
    %229 = vmatpush1.msra.mxu0 %v85
    %230 = vmatprep.subr.mxu0 %v94
    %231 = vmatpush1.msra.mxu0 %v93
    %232 = vmatprep.subr.mxu0 0.0
    %233 = vmatpush1.msra.mxu0 0.0
    %234 = vmatprep.subr.mxu0 0.0
    %235 = vmatpush1.msra.mxu0 0.0
    %236 = vmatprep.subr.mxu0 0.0
    %237 = vmatpush1.msra.mxu0 0.0
    %238 = vmatprep.subr.mxu0 0.0
    %239 = vmatpush1.msra.mxu0 0.0
    %240 = vmatprep.subr.mxu0 0.0
    %241 = vmatpush1.msra.mxu0 0.0
    %242 = vmatprep.subr.mxu0 0.0
    %243 = vmatpush1.msra.mxu0 0.0
    %244 = vmatprep.subr.mxu0 0.0
    %245 = vmatpush1.msra.mxu0 0.0
    %246 = vmatprep.subr.mxu0 0.0
    %247 = vmatpush1.msra.mxu0 0.0
    %248 = vmatprep.subr.mxu0 0.0
    %249 = vmatpush1.msra.mxu0 0.0
    %250 = vmatprep.subr.mxu0 0.0
    %251 = vmatpush1.msra.mxu0 0.0
    %252 = vmatprep.subr.mxu0 0.0
    %253 = vmatpush1.msra.mxu0 0.0
    %254 = vmatprep.subr.mxu0 0.0
    %255 = vmatpush1.msra.mxu0 0.0
    %256 = vmatprep.subr.mxu0 0.0
    %257 = vmatpush1.msra.mxu0 0.0
    %258 = vmatprep.subr.mxu0 0.0
    %259 = vmatpush1.msra.mxu0 0.0
    %260 = vmatprep.subr.mxu0 0.0
    %261 = vmatpush1.msra.mxu0 0.0
    %262 = vmatprep.subr.mxu0 0.0
    %263 = vmatpush1.msra.mxu0 0.0
    %264 = vmatprep.subr.mxu0 0.0
    %265 = vmatpush1.msra.mxu0 0.0
    %266 = vmatprep.subr.mxu0 0.0
    %267 = vmatpush1.msra.mxu0 0.0
    %268 = vmatprep.subr.mxu0 0.0
    %269 = vmatpush1.msra.mxu0 0.0
    %270 = vmatprep.subr.mxu0 0.0
    %271 = vmatpush1.msra.mxu0 0.0
    %272 = vmatprep.subr.mxu0 0.0
    %273 = vmatpush1.msra.mxu0 0.0
    %274 = vmatprep.subr.mxu0 0.0
    %275 = vmatpush1.msra.mxu0 0.0
    %276 = vmatprep.subr.mxu0 0.0
    %277 = vmatpush1.msra.mxu0 0.0
    %278 = vmatprep.subr.mxu0 0.0
    %279 = vmatpush1.msra.mxu0 0.0
    %280 = vmatprep.mubr.f32.mxu0 0.0
    %281 = vmatmul.mubr.f32.gmra.mrb[0].mxu0 %v143
    %v282 = vpop.f32.mrb[0].mxu0
    %v283 = vadd.f32 %v112, %v282
    %v284 = vpop.f32.mrb[0].mxu0
    %v285 = vadd.f32 %v116, %v284
    %286 = vdwg.mxu0
    %287 = vmatprep.subr.mxu0 %v40
    %288 = vmatpush1.msra.mxu0 %v39
    %289 = vmatprep.subr.mxu0 %v48
    %290 = vmatpush1.msra.mxu0 %v47
    %291 = vmatprep.subr.mxu0 %v56
    %292 = vmatpush1.msra.mxu0 %v55
    %293 = vmatprep.subr.mxu0 %v64
    %294 = vmatpush1.msra.mxu0 %v63
    %295 = vmatprep.subr.mxu0 %v72
    %296 = vmatpush1.msra.mxu0 %v71
    %297 = vmatprep.subr.mxu0 %v80
    %298 = vmatpush1.msra.mxu0 %v79
    %299 = vmatprep.subr.mxu0 %v88
    %300 = vmatpush1.msra.mxu0 %v87
    %301 = vmatprep.subr.mxu0 %v96
    %302 = vmatpush1.msra.mxu0 %v95
    %303 = vmatprep.subr.mxu0 0.0
    %304 = vmatpush1.msra.mxu0 0.0
    %305 = vmatprep.subr.mxu0 0.0
    %306 = vmatpush1.msra.mxu0 0.0
    %307 = vmatprep.subr.mxu0 0.0
    %308 = vmatpush1.msra.mxu0 0.0
    %309 = vmatprep.subr.mxu0 0.0
    %310 = vmatpush1.msra.mxu0 0.0
    %311 = vmatprep.subr.mxu0 0.0
    %312 = vmatpush1.msra.mxu0 0.0
    %313 = vmatprep.subr.mxu0 0.0
    %314 = vmatpush1.msra.mxu0 0.0
    %315 = vmatprep.subr.mxu0 0.0
    %316 = vmatpush1.msra.mxu0 0.0
    %317 = vmatprep.subr.mxu0 0.0
    %318 = vmatpush1.msra.mxu0 0.0
    %319 = vmatprep.subr.mxu0 0.0
    %320 = vmatpush1.msra.mxu0 0.0
    %321 = vmatprep.subr.mxu0 0.0
    %322 = vmatpush1.msra.mxu0 0.0
    %323 = vmatprep.subr.mxu0 0.0
    %324 = vmatpush1.msra.mxu0 0.0
    %325 = vmatprep.subr.mxu0 0.0
    %326 = vmatpush1.msra.mxu0 0.0
    %327 = vmatprep.subr.mxu0 0.0
    %328 = vmatpush1.msra.mxu0 0.0
    %329 = vmatprep.subr.mxu0 0.0
    %330 = vmatpush1.msra.mxu0 0.0
    %331 = vmatprep.subr.mxu0 0.0
    %332 = vmatpush1.msra.mxu0 0.0
    %333 = vmatprep.subr.mxu0 0.0
    %334 = vmatpush1.msra.mxu0 0.0
    %335 = vmatprep.subr.mxu0 0.0
    %336 = vmatpush1.msra.mxu0 0.0
    %337 = vmatprep.subr.mxu0 0.0
    %338 = vmatpush1.msra.mxu0 0.0
    %339 = vmatprep.subr.mxu0 0.0
    %340 = vmatpush1.msra.mxu0 0.0
    %341 = vmatprep.subr.mxu0 0.0
    %342 = vmatpush1.msra.mxu0 0.0
    %343 = vmatprep.subr.mxu0 0.0
    %344 = vmatpush1.msra.mxu0 0.0
    %345 = vmatprep.subr.mxu0 0.0
    %346 = vmatpush1.msra.mxu0 0.0
    %347 = vmatprep.subr.mxu0 0.0
    %348 = vmatpush1.msra.mxu0 0.0
    %349 = vmatprep.subr.mxu0 0.0
    %350 = vmatpush1.msra.mxu0 0.0
    %351 = vmatprep.mubr.f32.mxu0 0.0
    %352 = vmatmul.mubr.f32.gmra.mrb[0].mxu0 %v143
    %v353 = vpop.f32.mrb[0].mxu0
    %v354 = vadd.f32 %v120, %v353
    %v355 = vpop.f32.mrb[0].mxu0
    %v356 = vadd.f32 %v124, %v355
    %357 = vdwg.mxu0
    %358 = vmatprep.subr.mxu0 %v42
    %359 = vmatpush1.msra.mxu0 %v41
    %360 = vmatprep.subr.mxu0 %v50
    %361 = vmatpush1.msra.mxu0 %v49
    %362 = vmatprep.subr.mxu0 %v58
    %363 = vmatpush1.msra.mxu0 %v57
    %364 = vmatprep.subr.mxu0 %v66
    %365 = vmatpush1.msra.mxu0 %v65
    %366 = vmatprep.subr.mxu0 %v74
    %367 = vmatpush1.msra.mxu0 %v73
    %368 = vmatprep.subr.mxu0 %v82
    %369 = vmatpush1.msra.mxu0 %v81
    %370 = vmatprep.subr.mxu0 %v90
    %371 = vmatpush1.msra.mxu0 %v89
    %372 = vmatprep.subr.mxu0 %v98
    %373 = vmatpush1.msra.mxu0 %v97
    %374 = vmatprep.subr.mxu0 0.0
    %375 = vmatpush1.msra.mxu0 0.0
    %376 = vmatprep.subr.mxu0 0.0
    %377 = vmatpush1.msra.mxu0 0.0
    %378 = vmatprep.subr.mxu0 0.0
    %379 = vmatpush1.msra.mxu0 0.0
    %380 = vmatprep.subr.mxu0 0.0
    %381 = vmatpush1.msra.mxu0 0.0
    %382 = vmatprep.subr.mxu0 0.0
    %383 = vmatpush1.msra.mxu0 0.0
    %384 = vmatprep.subr.mxu0 0.0
    %385 = vmatpush1.msra.mxu0 0.0
    %386 = vmatprep.subr.mxu0 0.0
    %387 = vmatpush1.msra.mxu0 0.0
    %388 = vmatprep.subr.mxu0 0.0
    %389 = vmatpush1.msra.mxu0 0.0
    %390 = vmatprep.subr.mxu0 0.0
    %391 = vmatpush1.msra.mxu0 0.0
    %392 = vmatprep.subr.mxu0 0.0
    %393 = vmatpush1.msra.mxu0 0.0
    %394 = vmatprep.subr.mxu0 0.0
    %395 = vmatpush1.msra.mxu0 0.0
    %396 = vmatprep.subr.mxu0 0.0
    %397 = vmatpush1.msra.mxu0 0.0
    %398 = vmatprep.subr.mxu0 0.0
    %399 = vmatpush1.msra.mxu0 0.0
    %400 = vmatprep.subr.mxu0 0.0
    %401 = vmatpush1.msra.mxu0 0.0
    %402 = vmatprep.subr.mxu0 0.0
    %403 = vmatpush1.msra.mxu0 0.0
    %404 = vmatprep.subr.mxu0 0.0
    %405 = vmatpush1.msra.mxu0 0.0
    %406 = vmatprep.subr.mxu0 0.0
    %407 = vmatpush1.msra.mxu0 0.0
    %408 = vmatprep.subr.mxu0 0.0
    %409 = vmatpush1.msra.mxu0 0.0
    %410 = vmatprep.subr.mxu0 0.0
    %411 = vmatpush1.msra.mxu0 0.0
    %412 = vmatprep.subr.mxu0 0.0
    %413 = vmatpush1.msra.mxu0 0.0
    %414 = vmatprep.subr.mxu0 0.0
    %415 = vmatpush1.msra.mxu0 0.0
    %416 = vmatprep.subr.mxu0 0.0
    %417 = vmatpush1.msra.mxu0 0.0
    %418 = vmatprep.subr.mxu0 0.0
    %419 = vmatpush1.msra.mxu0 0.0
    %420 = vmatprep.subr.mxu0 0.0
    %421 = vmatpush1.msra.mxu0 0.0
    %422 = vmatprep.mubr.f32.mxu0 0.0
    %423 = vmatmul.mubr.f32.gmra.mrb[0].mxu0 %v143
    %v424 = vpop.f32.mrb[0].mxu0
    %v425 = vadd.f32 %v128, %v424
    %v426 = vpop.f32.mrb[0].mxu0
    %v427 = vadd.f32 %v132, %v426
    %428 = vdwg.mxu0
    %v437 = vcombine.low %v212, %v214
    %v438 = vcombine.low %v283, %v285
    %v439 = vcombine.low %v354, %v356
    %v440 = vcombine.low %v425, %v427
    %v442 = vunpack.c.l.s4 1966171168
    %v443 = vunpack.c.0.s8 %v442
    %v444 = vlaneseq
    %v445 = vshrl.u32 %v444, 7
    %v446 = vsub.s32 %v443, %v445
    %v447 = vrot.slane %v437, %v446
    %v449 = vunpack.c.l.s4 1966171168
    %v450 = vunpack.c.0.s8 %v449
    %v451 = vlaneseq
    %v452 = vshrl.u32 %v451, 7
    %v453 = vsub.s32 %v450, %v452
    %v454 = vrot.slane %v438, %v453
    %v456 = vunpack.c.l.s4 1966171168
    %v457 = vunpack.c.0.s8 %v456
    %v458 = vlaneseq
    %v459 = vshrl.u32 %v458, 7
    %v460 = vsub.s32 %v457, %v459
    %v461 = vrot.slane %v439, %v460
    %v463 = vunpack.c.l.s4 1966171168
    %v464 = vunpack.c.0.s8 %v463
    %v465 = vlaneseq
    %v466 = vshrl.u32 %v465, 7
    %v467 = vsub.s32 %v464, %v466
    %v468 = vrot.slane %v440, %v467
    %v469 = vcombine.low %v447, %v454
    %v470 = vcombine.low %v461, %v468
    %v472 = vunpack.c.l.s4 1966171168
    %v473 = vunpack.c.0.s8 %v472
    %v474 = vlaneseq
    %v475 = vshrl.u32 %v474, 7
    %v476 = vsub.s32 %v473, %v475
    %v477 = vrot.slane %v469, %v476
    %v479 = vunpack.c.l.s4 1966171168
    %v480 = vunpack.c.0.s8 %v479
    %v481 = vlaneseq
    %v482 = vshrl.u32 %v481, 7
    %v483 = vsub.s32 %v480, %v482
    %v484 = vrot.slane %v470, %v483
    %v485 = vcombine.low %v477, %v484
    %487 = vst [vmem:[#allocation2] sm:$0xff] %v485
    %v488 = vld [vmem:[#allocation2] sm:$0x1]
    %vm489 = vcmask 516096
    %490 = vst.msk [vmem:[#allocation3] sm:$0x1] %vm489, %v488
    %v491 = vld [vmem:[#allocation2] sm:$0x1]
    %v493 = vlaneseq
    %v494 = vshrl.u32 %v493, 7
    %v495 = vsub.s32 0, %v494
    %v496 = vrot.slane %v491, %v495
    %497 = vrot.lane.b32.xlu0 %v496, 64
    %v498 = vpop.permute.xlu0 %497
    %500 = vst.msk [vmem:[#allocation3 + $0x1] sm:$0x1] %vm489, %v498
    %v501 = vld [vmem:[#allocation2 + $0x1] sm:$0x1]
    %502 = vst.msk [vmem:[#allocation3 + $0x2] sm:$0x1] %vm489, %v501
    %v503 = vld [vmem:[#allocation2 + $0x1] sm:$0x1]
    %v505 = vlaneseq
    %v506 = vshrl.u32 %v505, 7
    %v507 = vsub.s32 0, %v506
    %v508 = vrot.slane %v503, %v507
    %509 = vrot.lane.b32.xlu0 %v508, 64
    %v510 = vpop.permute.xlu0 %509
    %512 = vst.msk [vmem:[#allocation3 + $0x3] sm:$0x1] %vm489, %v510
    %v513 = vld [vmem:[#allocation2 + $0x2] sm:$0x1]
    %514 = vst.msk [vmem:[#allocation3 + $0x4] sm:$0x1] %vm489, %v513
    %v515 = vld [vmem:[#allocation2 + $0x2] sm:$0x1]
    %v517 = vlaneseq
    %v518 = vshrl.u32 %v517, 7
    %v519 = vsub.s32 0, %v518
    %v520 = vrot.slane %v515, %v519
    %521 = vrot.lane.b32.xlu0 %v520, 64
    %v522 = vpop.permute.xlu0 %521
    %524 = vst.msk [vmem:[#allocation3 + $0x5] sm:$0x1] %vm489, %v522
    %v525 = vld [vmem:[#allocation2 + $0x3] sm:$0x1]
    %526 = vst.msk [vmem:[#allocation3 + $0x6] sm:$0x1] %vm489, %v525
    %v527 = vld [vmem:[#allocation2 + $0x3] sm:$0x1]
    %v529 = vlaneseq
    %v530 = vshrl.u32 %v529, 7
    %v531 = vsub.s32 0, %v530
    %v532 = vrot.slane %v527, %v531
    %533 = vrot.lane.b32.xlu0 %v532, 64
    %v534 = vpop.permute.xlu0 %533
    %536 = vst.msk [vmem:[#allocation3 + $0x7] sm:$0x1] %vm489, %v534
    %v537 = vld [vmem:[#allocation2 + $0x4] sm:$0x1]
    %538 = vst.msk [vmem:[#allocation3 + $0x8] sm:$0x1] %vm489, %v537
    %v539 = vld [vmem:[#allocation2 + $0x4] sm:$0x1]
    %v541 = vlaneseq
    %v542 = vshrl.u32 %v541, 7
    %v543 = vsub.s32 0, %v542
    %v544 = vrot.slane %v539, %v543
    %545 = vrot.lane.b32.xlu0 %v544, 64
    %v546 = vpop.permute.xlu0 %545
    %548 = vst.msk [vmem:[#allocation3 + $0x9] sm:$0x1] %vm489, %v546
    %v549 = vld [vmem:[#allocation2 + $0x5] sm:$0x1]
    %550 = vst.msk [vmem:[#allocation3 + $0xa] sm:$0x1] %vm489, %v549
    %v551 = vld [vmem:[#allocation2 + $0x5] sm:$0x1]
    %v553 = vlaneseq
    %v554 = vshrl.u32 %v553, 7
    %v555 = vsub.s32 0, %v554
    %v556 = vrot.slane %v551, %v555
    %557 = vrot.lane.b32.xlu0 %v556, 64
    %v558 = vpop.permute.xlu0 %557
    %560 = vst.msk [vmem:[#allocation3 + $0xb] sm:$0x1] %vm489, %v558
    %v561 = vld [vmem:[#allocation2 + $0x6] sm:$0x1]
    %562 = vst.msk [vmem:[#allocation3 + $0xc] sm:$0x1] %vm489, %v561
    %v563 = vld [vmem:[#allocation2 + $0x6] sm:$0x1]
    %v565 = vlaneseq
    %v566 = vshrl.u32 %v565, 7
    %v567 = vsub.s32 0, %v566
    %v568 = vrot.slane %v563, %v567
    %569 = vrot.lane.b32.xlu0 %v568, 64
    %v570 = vpop.permute.xlu0 %569
    %572 = vst.msk [vmem:[#allocation3 + $0xd] sm:$0x1] %vm489, %v570
    %v573 = vld [vmem:[#allocation2 + $0x7] sm:$0x1]
    %574 = vst.msk [vmem:[#allocation3 + $0xe] sm:$0x1] %vm489, %v573
    %v575 = vld [vmem:[#allocation2 + $0x7] sm:$0x1]
    %v577 = vlaneseq
    %v578 = vshrl.u32 %v577, 7
    %v579 = vsub.s32 0, %v578
    %v580 = vrot.slane %v575, %v579
    %581 = vrot.lane.b32.xlu0 %v580, 64
    %v582 = vpop.permute.xlu0 %581
    %584 = vst.msk [vmem:[#allocation3 + $0xf] sm:$0x1] %vm489, %v582
    %v585 = vld [vmem:[#allocation3] sm:$0xff]
    %v586 = vld [vmem:[#allocation3 + $0x8] sm:$0xff]
    %v587 = vld [vmem:[%s3] sm:$0xff]
    %v588 = vld [vmem:[%s3 + $0x8] sm:$0xff]
    %v589 = vld [vmem:[%s3 + $0x10] sm:$0xff]
    %v590 = vld [vmem:[%s3 + $0x18] sm:$0xff]
    %v591 = vld [vmem:[%s3 + $0x20] sm:$0xff]
    %v592 = vld [vmem:[%s3 + $0x28] sm:$0xff]
    %v593 = vld [vmem:[%s3 + $0x30] sm:$0xff]
    %v594 = vld [vmem:[%s3 + $0x38] sm:$0xff]
    %v595 = vld [vmem:[%s3 + $0x40] sm:$0xff]
    %v596 = vld [vmem:[%s3 + $0x48] sm:$0xff]
    %v597 = vld [vmem:[%s3 + $0x50] sm:$0xff]
    %v598 = vld [vmem:[%s3 + $0x58] sm:$0xff]
    %v599 = vld [vmem:[%s3 + $0x60] sm:$0xff]
    %v600 = vld [vmem:[%s3 + $0x68] sm:$0xff]
    %v601 = vld [vmem:[%s3 + $0x70] sm:$0xff]
    %v602 = vld [vmem:[%s3 + $0x78] sm:$0xff]
    %v603 = vld [vmem:[%s4] sm:$0x3]
    %v605 = vlaneseq
    %v606 = vshrl.u32 %v605, 7
    %v607 = vsub.s32 0, %v606
    %v608 = vrot.slane %v603, %v607
    %v609 = vlaneseq
    %v610 = vshrl.u32 %v609, 7
    %v611 = vsub.s32 1, %v610
    %v612 = vrot.slane %v603, %v611
    %v616 = vsel %vm141, %v585, 0
    %v619 = vsel %vm141, %v586, 0
    %621 = vmatprep.subr.mxu0 %v588
    %622 = vmatpush1.msra.mxu0 %v587
    %623 = vmatprep.subr.mxu0 %v590
    %624 = vmatpush1.msra.mxu0 %v589
    %625 = vmatprep.subr.mxu0 %v592
    %626 = vmatpush1.msra.mxu0 %v591
    %627 = vmatprep.subr.mxu0 %v594
    %628 = vmatpush1.msra.mxu0 %v593
    %629 = vmatprep.subr.mxu0 %v596
    %630 = vmatpush1.msra.mxu0 %v595
    %631 = vmatprep.subr.mxu0 %v598
    %632 = vmatpush1.msra.mxu0 %v597
    %633 = vmatprep.subr.mxu0 %v600
    %634 = vmatpush1.msra.mxu0 %v599
    %635 = vmatprep.subr.mxu0 %v602
    %636 = vmatpush1.msra.mxu0 %v601
    %637 = vmatprep.subr.mxu0 0.0
    %638 = vmatpush1.msra.mxu0 0.0
    %639 = vmatprep.subr.mxu0 0.0
    %640 = vmatpush1.msra.mxu0 0.0
    %641 = vmatprep.subr.mxu0 0.0
    %642 = vmatpush1.msra.mxu0 0.0
    %643 = vmatprep.subr.mxu0 0.0
    %644 = vmatpush1.msra.mxu0 0.0
    %645 = vmatprep.subr.mxu0 0.0
    %646 = vmatpush1.msra.mxu0 0.0
    %647 = vmatprep.subr.mxu0 0.0
    %648 = vmatpush1.msra.mxu0 0.0
    %649 = vmatprep.subr.mxu0 0.0
    %650 = vmatpush1.msra.mxu0 0.0
    %651 = vmatprep.subr.mxu0 0.0
    %652 = vmatpush1.msra.mxu0 0.0
    %653 = vmatprep.subr.mxu0 0.0
    %654 = vmatpush1.msra.mxu0 0.0
    %655 = vmatprep.subr.mxu0 0.0
    %656 = vmatpush1.msra.mxu0 0.0
    %657 = vmatprep.subr.mxu0 0.0
    %658 = vmatpush1.msra.mxu0 0.0
    %659 = vmatprep.subr.mxu0 0.0
    %660 = vmatpush1.msra.mxu0 0.0
    %661 = vmatprep.subr.mxu0 0.0
    %662 = vmatpush1.msra.mxu0 0.0
    %663 = vmatprep.subr.mxu0 0.0
    %664 = vmatpush1.msra.mxu0 0.0
    %665 = vmatprep.subr.mxu0 0.0
    %666 = vmatpush1.msra.mxu0 0.0
    %667 = vmatprep.subr.mxu0 0.0
    %668 = vmatpush1.msra.mxu0 0.0
    %669 = vmatprep.subr.mxu0 0.0
    %670 = vmatpush1.msra.mxu0 0.0
    %671 = vmatprep.subr.mxu0 0.0
    %672 = vmatpush1.msra.mxu0 0.0
    %673 = vmatprep.subr.mxu0 0.0
    %674 = vmatpush1.msra.mxu0 0.0
    %675 = vmatprep.subr.mxu0 0.0
    %676 = vmatpush1.msra.mxu0 0.0
    %677 = vmatprep.subr.mxu0 0.0
    %678 = vmatpush1.msra.mxu0 0.0
    %679 = vmatprep.subr.mxu0 0.0
    %680 = vmatpush1.msra.mxu0 0.0
    %681 = vmatprep.subr.mxu0 0.0
    %682 = vmatpush1.msra.mxu0 0.0
    %683 = vmatprep.subr.mxu0 0.0
    %684 = vmatpush1.msra.mxu0 0.0
    %685 = vmatprep.mubr.f32.mxu0 0.0
    %686 = vmatmul.mubr.f32.gmra.mrb[0].mxu0 %v616
    %v687 = vpop.f32.mrb[0].mxu0
    %v688 = vadd.f32 %v608, %v687
    %v689 = vpop.f32.mrb[0].mxu0
    %v690 = vadd.f32 %v612, %v689
    %691 = vmatprep.mubr.f32.mxu0 0.0
    %692 = vmatmul.mubr.f32.gmra.mrb[0].mxu0 %v619
    %v693 = vpop.f32.mrb[0].mxu0
    %v694 = vadd.f32 %v608, %v693
    %v695 = vpop.f32.mrb[0].mxu0
    %v696 = vadd.f32 %v612, %v695
    %697 = vdwg.mxu0
    %698 = vst [vmem:[%s5] sm:$0xff] %v688
    %699 = vst [vmem:[%s5 + $0x8] sm:$0xff] %v690
    %700 = vst [vmem:[%s5 + $0x10] sm:$0xff] %v694
    %701 = vst [vmem:[%s5 + $0x18] sm:$0xff] %v696
    // Predicated region
    $region26: #{hypernetwork_cnn_forward.1} parent=1 // pred_check
      _
    $region27: #{hypernetwork_cnn_forward.1} parent=1 // pred_check_branch
      %703 = sbr.rel (0) target = $region29
    $region28: #{hypernetwork_cnn_forward.1} parent=1 // pred_region
      _
    $region29: #{hypernetwork_cnn_forward.1} parent=1 // pred_fallthru
      _
    // Predicated region
    $region30: #{hypernetwork_cnn_forward.1} parent=1 // pred_check
      _
    $region31: #{hypernetwork_cnn_forward.1} parent=1 // pred_check_branch
      %705 = sbr.rel (0) target = $region33
    $region32: #{hypernetwork_cnn_forward.1} parent=1 // pred_region
      _
    $region33: #{hypernetwork_cnn_forward.1} parent=1 // pred_fallthru
      _
    %706 = vsyncpa [#allocation5], 1

</llo_original>
